<compile_context>
chip_gen: v7x
topology: tpu7x:2x2x1
jax: 0.10.0
libtpu: 0.0.40
codegen_flags: <defaults>
</compile_context>

<pallas_src>
import functools
import math

import jax
import jax.numpy as jnp
from jax.experimental import pallas as pl
from jax.experimental.pallas import tpu as pltpu


def _attention_kernel(x_ref, wqkv_ref, bqkv_ref, wo_ref, bo_ref, o_ref, ctx_ref,
                      *, num_heads, seq, block_b):
    """One grid step == `block_b` batch elements, flattened to (block_b*seq, H) rows."""
    hidden = x_ref.shape[-1]
    head_dim = hidden // num_heads

    x = x_ref[...]                                                  # (rows, H) bf16

    # --- Fused QKV projection: one wide MXU matmul, f32 accumulation. -------------
    qkv = jnp.dot(x, wqkv_ref[...], preferred_element_type=jnp.float32)
    qkv = (qkv + bqkv_ref[...]).astype(jnp.bfloat16)                # (rows, 3H), one cast pass

    # --- Attention core: per (batch-in-block, head), tiny 2-D MXU matmuls. --------
    # Static Python loops -> static slices only (zero lowering risk); only one
    # (S,S) f32 score tile is live per iteration.
    for b in range(block_b):
        r0 = b * seq
        for h in range(num_heads):
            c = h * head_dim
            q = qkv[r0:r0 + seq, c:c + head_dim]                    # (S, D) bf16, pre-scaled
            k = qkv[r0:r0 + seq, hidden + c:hidden + c + head_dim]  # (S, D) bf16
            v = qkv[r0:r0 + seq, 2 * hidden + c:2 * hidden + c + head_dim]

            # QK^T without an explicit transpose (contract last dims).
            scores = jnp.einsum("sd,td->st", q, k,
                                preferred_element_type=jnp.float32)  # (S, S) f32

            # Numerically-stable softmax; reciprocal on the EUP slot.
            m = jnp.max(scores, axis=-1, keepdims=True)
            p = jnp.exp(scores - m)
            denom = jnp.sum(p, axis=-1, keepdims=True)
            probs = (p * pl.reciprocal(denom, approx=True)).astype(jnp.bfloat16)
            # TODO(synk): attn_dropout applied here in training mode (identity in eval).

            ctx = jnp.dot(probs, v, preferred_element_type=jnp.float32)  # (S, D) f32
            ctx_ref[r0:r0 + seq, c:c + head_dim] = ctx.astype(jnp.bfloat16)

    # --- Output projection: single MXU matmul contracting the full H = nh*D axis. -
    out = jnp.dot(ctx_ref[...], wo_ref[...],
                  preferred_element_type=jnp.float32) + bo_ref[...]      # (rows, H) f32
    # TODO(synk): proj_dropout applied here in training mode (identity in eval).
    o_ref[...] = out.astype(o_ref.dtype)


def pack_params(params, *, num_heads):
    """Pack nn.Linear-style weights into fused, bf16, scale-folded 2-D tiles."""
    wq, bq = params["wq"], params["bq"]
    wk, bk = params["wk"], params["bk"]
    wv, bv = params["wv"], params["bv"]
    wo, bo = params["wo"], params["bo"]

    hidden = wq.shape[0]
    head_dim = hidden // num_heads
    scale = 1.0 / math.sqrt(head_dim)

    # Column layout of wqkv: [Q (all heads, head-major) | K | V]; Q/K/V boundaries at
    # multiples of H -> lane-aligned splits whenever H % 128 == 0 (e.g. ViT-Base).
    wqkv = jnp.concatenate([wq * scale, wk, wv], axis=1).astype(jnp.bfloat16)   # (H, 3H)
    bqkv = jnp.concatenate([bq * scale, bk, bv], axis=1).astype(jnp.float32)    # (1, 3H)
    wo_p = wo.astype(jnp.bfloat16)                                              # (H, H)
    bo_p = bo.astype(jnp.float32)                                               # (1, H)
    return dict(wqkv=wqkv, bqkv=bqkv, wo=wo_p, bo=bo_p, num_heads=num_heads)


def _pick_block_b(B, S, H, vmem_budget_bytes=16 * 1024 * 1024):
    """Batch elements folded into each grid step.

    Bigger blocks amortize per-step overhead and give the MXU a taller M dim.
    We cap the per-step activation working set and prefer an EVEN number of grid
    steps so v7x's two TensorCores both get work.
    """
    def act_bytes(bb):
        rows = bb * S
        # qkv f32 (3H wide) + bf16 x block (x2 buffers) + bf16 ctx scratch + f32 out block (x2)
        return rows * H * (12 + 2 * 2 + 2 + 2 * 4)

    divisors = [bb for bb in range(1, B + 1)
                if B % bb == 0 and act_bytes(bb) <= vmem_budget_bytes]
    if not divisors:
        return 1
    even_steps = [bb for bb in divisors if (B // bb) % 2 == 0]
    return max(even_steps or divisors)


def attention_forward(hidden_states, packed, *, block_b=None):
    """hidden_states: (B, S, H) float32. packed: output of pack_params."""
    B, S, H = hidden_states.shape
    wqkv, bqkv, wo, bo = packed["wqkv"], packed["bqkv"], packed["wo"], packed["bo"]
    num_heads = packed["num_heads"]

    if block_b is None:
        block_b = _pick_block_b(B, S, H)
    assert B % block_b == 0
    rows = block_b * S

    # bf16 input halves x DMA bytes; flatten to 2-D so blocks are lane-dense row slabs.
    x2 = hidden_states.reshape(B * S, H).astype(jnp.bfloat16)

    def full(arr):
        # Whole-array block, constant index -> DMA'd once, resident across the grid.
        return pl.BlockSpec(arr.shape, lambda i, _n=arr.ndim: (0,) * _n)

    kernel = functools.partial(_attention_kernel,
                               num_heads=num_heads, seq=S, block_b=block_b)

    out2 = pl.pallas_call(
        kernel,
        out_shape=jax.ShapeDtypeStruct((B * S, H), hidden_states.dtype),
        grid_spec=pltpu.PrefetchScalarGridSpec(
            num_scalar_prefetch=0,
            grid=(B // block_b,),
            in_specs=[pl.BlockSpec((rows, H), lambda i: (i, 0)),
                      full(wqkv), full(bqkv), full(wo), full(bo)],
            out_specs=pl.BlockSpec((rows, H), lambda i: (i, 0)),
            scratch_shapes=[pltpu.VMEM((rows, H), jnp.bfloat16)],   # ctx slab
        ),
        compiler_params=pltpu.CompilerParams(
            dimension_semantics=("parallel",),
            vmem_limit_bytes=32 * 1024 * 1024),
    )(x2, wqkv, bqkv, wo, bo)

    return out2.reshape(B, S, H)


def _reference(hidden_states, params, *, num_heads):
    """Pure-JAX f32 reference mirroring the PyTorch forward (eval mode)."""
    B, S, H = hidden_states.shape
    D = H // num_heads

    def split_heads(t):  # (B, S, H) -> (B, nh, S, D)
        return t.reshape(B, S, num_heads, D).transpose(0, 2, 1, 3)

    q = split_heads(hidden_states @ params["wq"] + params["bq"][0])
    k = split_heads(hidden_states @ params["wk"] + params["bk"][0])
    v = split_heads(hidden_states @ params["wv"] + params["bv"][0])

    scores = jnp.einsum("bhqd,bhkd->bhqk", q, k) / math.sqrt(D)
    probs = jax.nn.softmax(scores, axis=-1)
    ctx = jnp.einsum("bhqk,bhkd->bhqd", probs, v)
    ctx = ctx.transpose(0, 2, 1, 3).reshape(B, S, H)
    return ctx @ params["wo"] + params["bo"][0]


def init_params(key, hidden):
    keys = jax.random.split(key, 8)

    def lin(kw, kb):
        w = jax.random.normal(kw, (hidden, hidden), jnp.float32) * 0.05
        b = jax.random.normal(kb, (1, hidden), jnp.float32) * 0.05
        return w, b

    wq, bq = lin(keys[0], keys[1])
    wk, bk = lin(keys[2], keys[3])
    wv, bv = lin(keys[4], keys[5])
    wo, bo = lin(keys[6], keys[7])
    return dict(wq=wq, bq=bq, wk=wk, bk=bk, wv=wv, bv=bv, wo=wo, bo=bo)


if __name__ == "__main__":
    # config: hidden_size=32, num_heads=4, seq=8, batch=2
    B, S, H, NH = 2, 8, 32, 4

    key = jax.random.PRNGKey(0)
    k_x, k_p = jax.random.split(key)
    x = jax.random.normal(k_x, (B, S, H), jnp.float32)
    params = init_params(k_p, H)
    packed = pack_params(params, num_heads=NH)

    out = attention_forward(x, packed)
    out = jax.block_until_ready(out)

    ref = _reference(x, params, num_heads=NH)
    assert out.shape == (B, S, H)
    # Tolerance covers bf16 MXU inputs + approximate (EUP) reciprocal in softmax.
    assert jnp.allclose(out, ref, atol=2e-2, rtol=2e-2), (
        f"mismatch vs reference, max |diff| = {jnp.max(jnp.abs(out - ref))}")

    print("KERNEL_OK")
</pallas_src>

<mosaic_0001>
module attributes {stable_mosaic.version = 11 : i64} {
  func.func @_attention_kernel(%arg0: i32, %arg1: memref<8x32xbf16, #tpu.memory_space<vmem>>, %arg2: memref<32x96xbf16, #tpu.memory_space<vmem>>, %arg3: memref<1x96xf32, #tpu.memory_space<vmem>>, %arg4: memref<32x32xbf16, #tpu.memory_space<vmem>>, %arg5: memref<1x32xf32, #tpu.memory_space<vmem>>, %arg6: memref<8x32xf32, #tpu.memory_space<vmem>>, %arg7: memref<8x32xbf16, #tpu.memory_space<vmem>>) attributes {dimension_semantics = [#tpu.dimension_semantics<parallel>], iteration_bounds = array<i64: 2>, scalar_prefetch = 0 : i64, scratch_operands = 1 : i64, tpu.core_type = #tpu.core_type<tc>, window_params = [{transform_indices = @transform_0, window_bounds = array<i64: 8, 32>}, {pipeline_mode = #tpu.pipeline_mode<synchronous>, transform_indices = @transform_1, window_bounds = array<i64: 32, 96>}, {pipeline_mode = #tpu.pipeline_mode<synchronous>, transform_indices = @transform_2, window_bounds = array<i64: 1, 96>}, {pipeline_mode = #tpu.pipeline_mode<synchronous>, transform_indices = @transform_3, window_bounds = array<i64: 32, 32>}, {pipeline_mode = #tpu.pipeline_mode<synchronous>, transform_indices = @transform_4, window_bounds = array<i64: 1, 32>}, {transform_indices = @transform_5, window_bounds = array<i64: 8, 32>}]} {
    %c0 = arith.constant 0 : index
    %c0_0 = arith.constant 0 : index
    %0 = vector.load %arg1[%c0, %c0_0] : memref<8x32xbf16, #tpu.memory_space<vmem>>, vector<8x32xbf16>
    %c0_1 = arith.constant 0 : index
    %c0_2 = arith.constant 0 : index
    %1 = vector.load %arg2[%c0_1, %c0_2] : memref<32x96xbf16, #tpu.memory_space<vmem>>, vector<32x96xbf16>
    %cst = arith.constant dense<0.000000e+00> : vector<8x96xf32>
    %2 = tpu.matmul %0, %1, %cst {dimension_numbers = #tpu.dot_dimension_numbers<[1], [0], [0], [1], [0, 0, 1, 1], [], []>} : vector<8x32xbf16>, vector<32x96xbf16>, vector<8x96xf32> -> vector<8x96xf32>
    %c0_3 = arith.constant 0 : index
    %c0_4 = arith.constant 0 : index
    %3 = vector.load %arg3[%c0_3, %c0_4] : memref<1x96xf32, #tpu.memory_space<vmem>>, vector<1x96xf32>
    %4 = vector.broadcast %3 : vector<1x96xf32> to vector<8x96xf32>
    %5 = arith.addf %2, %4 : vector<8x96xf32>
    %6 = arith.truncf %5 : vector<8x96xf32> to vector<8x96xbf16>
    %7 = vector.extract_strided_slice %6 {offsets = [0, 0], sizes = [8, 8], strides = [1, 1]} : vector<8x96xbf16> to vector<8x8xbf16>
    %8 = vector.extract_strided_slice %6 {offsets = [0, 32], sizes = [8, 8], strides = [1, 1]} : vector<8x96xbf16> to vector<8x8xbf16>
    %9 = vector.extract_strided_slice %6 {offsets = [0, 64], sizes = [8, 8], strides = [1, 1]} : vector<8x96xbf16> to vector<8x8xbf16>
    "tpu.trace_start"() <{level = 10 : i32, message = "sd,td->st"}> : () -> ()
    %cst_5 = arith.constant dense<0.000000e+00> : vector<8x8xf32>
    %10 = tpu.matmul %7, %8, %cst_5 {dimension_numbers = #tpu.dot_dimension_numbers<[1], [1], [0], [0], [0, 0, 1, 0], [], []>} : vector<8x8xbf16>, vector<8x8xbf16>, vector<8x8xf32> -> vector<8x8xf32>
    "tpu.trace_stop"() : () -> ()
    %cst_6 = arith.constant dense<0xFF800000> : vector<8xf32>
    %11 = vector.multi_reduction <maximumf>, %10, %cst_6 [1] : vector<8x8xf32> to vector<8xf32>
    %12 = vector.shape_cast %11 : vector<8xf32> to vector<8x1xf32>
    %13 = vector.broadcast %12 : vector<8x1xf32> to vector<8x8xf32>
    %14 = arith.subf %10, %13 : vector<8x8xf32>
    %15 = math.exp %14 : vector<8x8xf32>
    %cst_7 = arith.constant dense<0.000000e+00> : vector<8xf32>
    %16 = vector.multi_reduction <add>, %15, %cst_7 [1] : vector<8x8xf32> to vector<8xf32>
    %17 = vector.shape_cast %16 : vector<8xf32> to vector<8x1xf32>
    %18 = tpu.reciprocal %17 {approx = true} : vector<8x1xf32> -> vector<8x1xf32>
    %19 = vector.broadcast %18 : vector<8x1xf32> to vector<8x8xf32>
    %20 = arith.mulf %15, %19 : vector<8x8xf32>
    %21 = arith.truncf %20 : vector<8x8xf32> to vector<8x8xbf16>
    %cst_8 = arith.constant dense<0.000000e+00> : vector<8x8xf32>
    %22 = tpu.matmul %21, %9, %cst_8 {dimension_numbers = #tpu.dot_dimension_numbers<[1], [0], [0], [1], [0, 0, 1, 1], [], []>} : vector<8x8xbf16>, vector<8x8xbf16>, vector<8x8xf32> -> vector<8x8xf32>
    %23 = arith.truncf %22 : vector<8x8xf32> to vector<8x8xbf16>
    %c0_9 = arith.constant 0 : index
    %c0_10 = arith.constant 0 : index
    %24 = vector.load %arg7[%c0_9, %c0_10] : memref<8x32xbf16, #tpu.memory_space<vmem>>, vector<8x8xbf16>
    tpu.vector_store %arg7[%c0_9, %c0_10], %23 {strides = array<i32>} : memref<8x32xbf16, #tpu.memory_space<vmem>>, vector<8x8xbf16>,
    %25 = vector.extract_strided_slice %6 {offsets = [0, 8], sizes = [8, 8], strides = [1, 1]} : vector<8x96xbf16> to vector<8x8xbf16>
    %26 = vector.extract_strided_slice %6 {offsets = [0, 40], sizes = [8, 8], strides = [1, 1]} : vector<8x96xbf16> to vector<8x8xbf16>
    %27 = vector.extract_strided_slice %6 {offsets = [0, 72], sizes = [8, 8], strides = [1, 1]} : vector<8x96xbf16> to vector<8x8xbf16>
    "tpu.trace_start"() <{level = 10 : i32, message = "sd,td->st"}> : () -> ()
    %cst_11 = arith.constant dense<0.000000e+00> : vector<8x8xf32>
    %28 = tpu.matmul %25, %26, %cst_11 {dimension_numbers = #tpu.dot_dimension_numbers<[1], [1], [0], [0], [0, 0, 1, 0], [], []>} : vector<8x8xbf16>, vector<8x8xbf16>, vector<8x8xf32> -> vector<8x8xf32>
    "tpu.trace_stop"() : () -> ()
    %cst_12 = arith.constant dense<0xFF800000> : vector<8xf32>
    %29 = vector.multi_reduction <maximumf>, %28, %cst_12 [1] : vector<8x8xf32> to vector<8xf32>
    %30 = vector.shape_cast %29 : vector<8xf32> to vector<8x1xf32>
    %31 = vector.broadcast %30 : vector<8x1xf32> to vector<8x8xf32>
    %32 = arith.subf %28, %31 : vector<8x8xf32>
    %33 = math.exp %32 : vector<8x8xf32>
    %cst_13 = arith.constant dense<0.000000e+00> : vector<8xf32>
    %34 = vector.multi_reduction <add>, %33, %cst_13 [1] : vector<8x8xf32> to vector<8xf32>
    %35 = vector.shape_cast %34 : vector<8xf32> to vector<8x1xf32>
    %36 = tpu.reciprocal %35 {approx = true} : vector<8x1xf32> -> vector<8x1xf32>
    %37 = vector.broadcast %36 : vector<8x1xf32> to vector<8x8xf32>
    %38 = arith.mulf %33, %37 : vector<8x8xf32>
    %39 = arith.truncf %38 : vector<8x8xf32> to vector<8x8xbf16>
    %cst_14 = arith.constant dense<0.000000e+00> : vector<8x8xf32>
    %40 = tpu.matmul %39, %27, %cst_14 {dimension_numbers = #tpu.dot_dimension_numbers<[1], [0], [0], [1], [0, 0, 1, 1], [], []>} : vector<8x8xbf16>, vector<8x8xbf16>, vector<8x8xf32> -> vector<8x8xf32>
    %41 = arith.truncf %40 : vector<8x8xf32> to vector<8x8xbf16>
    %c0_15 = arith.constant 0 : index
    %c8 = arith.constant 8 : index
    %42 = vector.load %arg7[%c0_15, %c8] : memref<8x32xbf16, #tpu.memory_space<vmem>>, vector<8x8xbf16>
    tpu.vector_store %arg7[%c0_15, %c8], %41 {strides = array<i32>} : memref<8x32xbf16, #tpu.memory_space<vmem>>, vector<8x8xbf16>,
    %43 = vector.extract_strided_slice %6 {offsets = [0, 16], sizes = [8, 8], strides = [1, 1]} : vector<8x96xbf16> to vector<8x8xbf16>
    %44 = vector.extract_strided_slice %6 {offsets = [0, 48], sizes = [8, 8], strides = [1, 1]} : vector<8x96xbf16> to vector<8x8xbf16>
    %45 = vector.extract_strided_slice %6 {offsets = [0, 80], sizes = [8, 8], strides = [1, 1]} : vector<8x96xbf16> to vector<8x8xbf16>
    "tpu.trace_start"() <{level = 10 : i32, message = "sd,td->st"}> : () -> ()
    %cst_16 = arith.constant dense<0.000000e+00> : vector<8x8xf32>
    %46 = tpu.matmul %43, %44, %cst_16 {dimension_numbers = #tpu.dot_dimension_numbers<[1], [1], [0], [0], [0, 0, 1, 0], [], []>} : vector<8x8xbf16>, vector<8x8xbf16>, vector<8x8xf32> -> vector<8x8xf32>
    "tpu.trace_stop"() : () -> ()
    %cst_17 = arith.constant dense<0xFF800000> : vector<8xf32>
    %47 = vector.multi_reduction <maximumf>, %46, %cst_17 [1] : vector<8x8xf32> to vector<8xf32>
    %48 = vector.shape_cast %47 : vector<8xf32> to vector<8x1xf32>
    %49 = vector.broadcast %48 : vector<8x1xf32> to vector<8x8xf32>
    %50 = arith.subf %46, %49 : vector<8x8xf32>
    %51 = math.exp %50 : vector<8x8xf32>
    %cst_18 = arith.constant dense<0.000000e+00> : vector<8xf32>
    %52 = vector.multi_reduction <add>, %51, %cst_18 [1] : vector<8x8xf32> to vector<8xf32>
    %53 = vector.shape_cast %52 : vector<8xf32> to vector<8x1xf32>
    %54 = tpu.reciprocal %53 {approx = true} : vector<8x1xf32> -> vector<8x1xf32>
    %55 = vector.broadcast %54 : vector<8x1xf32> to vector<8x8xf32>
    %56 = arith.mulf %51, %55 : vector<8x8xf32>
    %57 = arith.truncf %56 : vector<8x8xf32> to vector<8x8xbf16>
    %cst_19 = arith.constant dense<0.000000e+00> : vector<8x8xf32>
    %58 = tpu.matmul %57, %45, %cst_19 {dimension_numbers = #tpu.dot_dimension_numbers<[1], [0], [0], [1], [0, 0, 1, 1], [], []>} : vector<8x8xbf16>, vector<8x8xbf16>, vector<8x8xf32> -> vector<8x8xf32>
    %59 = arith.truncf %58 : vector<8x8xf32> to vector<8x8xbf16>
    %c0_20 = arith.constant 0 : index
    %c16 = arith.constant 16 : index
    %60 = vector.load %arg7[%c0_20, %c16] : memref<8x32xbf16, #tpu.memory_space<vmem>>, vector<8x8xbf16>
    tpu.vector_store %arg7[%c0_20, %c16], %59 {strides = array<i32>} : memref<8x32xbf16, #tpu.memory_space<vmem>>, vector<8x8xbf16>,
    %61 = vector.extract_strided_slice %6 {offsets = [0, 24], sizes = [8, 8], strides = [1, 1]} : vector<8x96xbf16> to vector<8x8xbf16>
    %62 = vector.extract_strided_slice %6 {offsets = [0, 56], sizes = [8, 8], strides = [1, 1]} : vector<8x96xbf16> to vector<8x8xbf16>
    %63 = vector.extract_strided_slice %6 {offsets = [0, 88], sizes = [8, 8], strides = [1, 1]} : vector<8x96xbf16> to vector<8x8xbf16>
    "tpu.trace_start"() <{level = 10 : i32, message = "sd,td->st"}> : () -> ()
    %cst_21 = arith.constant dense<0.000000e+00> : vector<8x8xf32>
    %64 = tpu.matmul %61, %62, %cst_21 {dimension_numbers = #tpu.dot_dimension_numbers<[1], [1], [0], [0], [0, 0, 1, 0], [], []>} : vector<8x8xbf16>, vector<8x8xbf16>, vector<8x8xf32> -> vector<8x8xf32>
    "tpu.trace_stop"() : () -> ()
    %cst_22 = arith.constant dense<0xFF800000> : vector<8xf32>
    %65 = vector.multi_reduction <maximumf>, %64, %cst_22 [1] : vector<8x8xf32> to vector<8xf32>
    %66 = vector.shape_cast %65 : vector<8xf32> to vector<8x1xf32>
    %67 = vector.broadcast %66 : vector<8x1xf32> to vector<8x8xf32>
    %68 = arith.subf %64, %67 : vector<8x8xf32>
    %69 = math.exp %68 : vector<8x8xf32>
    %cst_23 = arith.constant dense<0.000000e+00> : vector<8xf32>
    %70 = vector.multi_reduction <add>, %69, %cst_23 [1] : vector<8x8xf32> to vector<8xf32>
    %71 = vector.shape_cast %70 : vector<8xf32> to vector<8x1xf32>
    %72 = tpu.reciprocal %71 {approx = true} : vector<8x1xf32> -> vector<8x1xf32>
    %73 = vector.broadcast %72 : vector<8x1xf32> to vector<8x8xf32>
    %74 = arith.mulf %69, %73 : vector<8x8xf32>
    %75 = arith.truncf %74 : vector<8x8xf32> to vector<8x8xbf16>
    %cst_24 = arith.constant dense<0.000000e+00> : vector<8x8xf32>
    %76 = tpu.matmul %75, %63, %cst_24 {dimension_numbers = #tpu.dot_dimension_numbers<[1], [0], [0], [1], [0, 0, 1, 1], [], []>} : vector<8x8xbf16>, vector<8x8xbf16>, vector<8x8xf32> -> vector<8x8xf32>
    %77 = arith.truncf %76 : vector<8x8xf32> to vector<8x8xbf16>
    %c0_25 = arith.constant 0 : index
    %c24 = arith.constant 24 : index
    %78 = vector.load %arg7[%c0_25, %c24] : memref<8x32xbf16, #tpu.memory_space<vmem>>, vector<8x8xbf16>
    tpu.vector_store %arg7[%c0_25, %c24], %77 {strides = array<i32>} : memref<8x32xbf16, #tpu.memory_space<vmem>>, vector<8x8xbf16>,
    %c0_26 = arith.constant 0 : index
    %c0_27 = arith.constant 0 : index
    %79 = vector.load %arg7[%c0_26, %c0_27] : memref<8x32xbf16, #tpu.memory_space<vmem>>, vector<8x32xbf16>
    %c0_28 = arith.constant 0 : index
    %c0_29 = arith.constant 0 : index
    %80 = vector.load %arg4[%c0_28, %c0_29] : memref<32x32xbf16, #tpu.memory_space<vmem>>, vector<32x32xbf16>
    %cst_30 = arith.constant dense<0.000000e+00> : vector<8x32xf32>
    %81 = tpu.matmul %79, %80, %cst_30 {dimension_numbers = #tpu.dot_dimension_numbers<[1], [0], [0], [1], [0, 0, 1, 1], [], []>} : vector<8x32xbf16>, vector<32x32xbf16>, vector<8x32xf32> -> vector<8x32xf32>
    %c0_31 = arith.constant 0 : index
    %c0_32 = arith.constant 0 : index
    %82 = vector.load %arg5[%c0_31, %c0_32] : memref<1x32xf32, #tpu.memory_space<vmem>>, vector<1x32xf32>
    %83 = vector.broadcast %82 : vector<1x32xf32> to vector<8x32xf32>
    %84 = arith.addf %81, %83 : vector<8x32xf32>
    %c0_33 = arith.constant 0 : index
    %c0_34 = arith.constant 0 : index
    %85 = vector.load %arg6[%c0_33, %c0_34] : memref<8x32xf32, #tpu.memory_space<vmem>>, vector<8x32xf32>
    tpu.vector_store %arg6[%c0_33, %c0_34], %84 {strides = array<i32>} : memref<8x32xf32, #tpu.memory_space<vmem>>, vector<8x32xf32>,
    return
  }
  func.func @transform_0(%arg0: i32) -> (i32, i32) {
    %c0_i32 = arith.constant 0 : i32
    %c0_i32_0 = arith.constant 0 : i32
    return %arg0, %c0_i32 : i32, i32
  }
  func.func @transform_1(%arg0: i32) -> (i32, i32) {
    %c0_i32 = arith.constant 0 : i32
    %c0_i32_0 = arith.constant 0 : i32
    %c0_i32_1 = arith.constant 0 : i32
    return %c0_i32, %c0_i32_0 : i32, i32
  }
  func.func @transform_2(%arg0: i32) -> (i32, i32) {
    %c0_i32 = arith.constant 0 : i32
    %c0_i32_0 = arith.constant 0 : i32
    %c0_i32_1 = arith.constant 0 : i32
    return %c0_i32, %c0_i32_0 : i32, i32
  }
  func.func @transform_3(%arg0: i32) -> (i32, i32) {
    %c0_i32 = arith.constant 0 : i32
    %c0_i32_0 = arith.constant 0 : i32
    %c0_i32_1 = arith.constant 0 : i32
    return %c0_i32, %c0_i32_0 : i32, i32
  }
  func.func @transform_4(%arg0: i32) -> (i32, i32) {
    %c0_i32 = arith.constant 0 : i32
    %c0_i32_0 = arith.constant 0 : i32
    %c0_i32_1 = arith.constant 0 : i32
    return %c0_i32, %c0_i32_0 : i32, i32
  }
  func.func @transform_5(%arg0: i32) -> (i32, i32) {
    %c0_i32 = arith.constant 0 : i32
    %c0_i32_0 = arith.constant 0 : i32
    return %arg0, %c0_i32 : i32, i32
  }
}

</mosaic_0001>

<llo_original>
// kernel: tpu_custom_call.1
$region0: #{tpu_custom_call.1}
  #allocation0 [shape = 'u32[]', space=smem, size = 0x4, offset = 0x4, fixed_abs, tag = 'smem constant byte address 0x4 - core index']
  #allocation1 [shape = 'u32[144,128]{1,0:T(1,128)}', space=vmem, size = 0x12000, scoped, tag = 'internal scratch']
  #allocation2 [shape = 'bf16[8,32]{1,0:T(8,128)(2,1)}', space=vmem, size = 0x800, scoped, tag = 'scratch operand']
  %s0 = inlined_call_operand.hbm [shape: bf16[16,32], index: 0, kind: input, shape index: {}]
  %s1 = inlined_call_operand.hbm [shape: bf16[32,96], index: 1, kind: input, shape index: {}]
  %s2 = inlined_call_operand.vmem [shape: f32[1,96], index: 2, kind: input, shape index: {}]
  %s3 = inlined_call_operand.hbm [shape: bf16[32,32], index: 3, kind: input, shape index: {}]
  %s4 = inlined_call_operand.vmem [shape: f32[1,32], index: 4, kind: input, shape index: {}]
  %s5 = inlined_call_operand.hbm [shape: f32[16,32], index: 5, kind: output, shape index: {}]
  %s6 = sld [smem:[#allocation0]]
  $region65: #{tpu_custom_call.1} parent=0
    _
  %s8 = ssub.s32 1, %s6
  %s9 = scalar_select 0, %s8, %s6
  $region1: #{tpu_custom_call.1} parent=0
    #allocation3 [shape = 'u8[4096]{0}', space=vmem, size = 0x1000, scoped, tag = 'input window, operand 0']
    #allocation4 [shape = 's32[2]{0}', space=sflag, size = 0x8, scoped, tag = 'scoped memory for tpu_custom_call.1']
    #allocation5 [shape = 's32[2]{0}', space=sflag, size = 0x8, scoped, tag = 'scoped memory for tpu_custom_call.1']
    #allocation6 [shape = 'u8[8192]{0}', space=vmem, size = 0x2000, scoped, tag = 'input window, operand 1, single buffered']
    #allocation7 [shape = 's32[1]{0}', space=sflag, size = 0x4, scoped, tag = 'scoped memory for tpu_custom_call.1']
    #allocation8 [shape = 'u8[8192]{0}', space=vmem, size = 0x2000, scoped, tag = 'input window, operand 3, single buffered']
    #allocation9 [shape = 'u8[8192]{0}', space=vmem, size = 0x2000, scoped, tag = 'output window, operand 0']
    %10 = vsyncpa [#allocation4], 0
    %s11 = scalar_lea.sflag [#allocation4], 1
    %12 = vsyncpa %s11, 0
    %13 = vsyncpa [#allocation7], 0
    %14 = vsyncpa [#allocation5], 0
    %s15 = scalar_lea.sflag [#allocation5], 1
    %16 = vsyncpa %s15, 0
    loop: start=0, step=1, limit=4
    $region2: #{tpu_custom_call.1} parent=1 // loop_pre_header
      _
    $region3: #{tpu_custom_call.1} parent=1 // loop_header
      %s18 = sphi 0, %s22
      %p19 = scmp.ge.s32.totalorder %s18, 4
      %s28 = sphi 0, %s30
      %s31 = sphi 0, %s28
      %s32 = sphi 0, %s31
      %s48 = sphi 0, %s32
      %s52 = sphi 0, %s52
      %s54 = sphi 0, %s52
      %s55 = sphi 0, %s54
      %s69 = sphi 0, %s55
      %s73 = sphi 0, %s73
      %s75 = sphi 0, %s73
      %s76 = sphi 0, %s75
      %s90 = sphi 0, %s76
      %s94 = sphi 0, %s94
      %s96 = sphi 0, %s94
      %s97 = sphi 0, %s96
      %s111 = sphi 0, %s97
      %s115 = sphi 0, %s115
      %s117 = sphi 0, %s115
      %s118 = sphi 0, %s117
      %s132 = sphi 0, %s118
      %s138 = sphi 0, %s140
      %s141 = sphi 0, %s138
      %s142 = sphi 0, %s141
      %s158 = sphi 0, %s142
    $region4: #{tpu_custom_call.1} parent=1 // loop_header_branch
      %21 = sbr.rel (%p19) target = $region8
    $region5: #{tpu_custom_call.1} parent=1 // loop_body
      %s23 = ssub.s32 %s18, 1
      %s24 = ssub.s32 %s18, 2
      %s25 = sadd.s32 %s18, 1
      %s26 = ssub.s32 %s18, %s25
      %p27 = scmp.eq.s32.totalorder %s26, 0
      %s29 = sadd.s32 %s28, 1
      %s30 = scalar_select %p27, %s28, %s29
      %p33 = pneg %p27
      %p34 = scmp.eq.s32.totalorder %s18, 1
      %p35 = por %p33, %p34
      %p36 = scmp.ne.s32.totalorder %s28, %s31
      %p37 = scmp.eq.s32.totalorder %s18, 0
      %p38 = por %p36, %p37
      %p39 = scmp.ne.s32.totalorder %s28, %s31
      %p40 = scmp.eq.s32.totalorder %s23, 1
      %p41 = por %p39, %p40
      %p42 = scmp.ne.s32.totalorder %s31, %s32
      %p43 = scmp.eq.s32.totalorder %s23, 0
      %p44 = por %p42, %p43
      %p45 = scmp.ne.s32.totalorder %s31, %s32
      %p46 = scmp.eq.s32.totalorder %s24, 1
      %p47 = por %p45, %p46
      %p49 = scmp.ne.s32.totalorder %s32, %s48
      %p50 = scmp.eq.s32.totalorder %s24, 0
      %p51 = por %p49, %p50
      %s53 = sadd.s32 %s52, 1
      %p56 = scmp.eq.s32.totalorder %s18, 1
      %p57 = scmp.ne.s32.totalorder %s52, %s54
      %p58 = scmp.eq.s32.totalorder %s18, 0
      %p59 = por %p57, %p58
      %p60 = scmp.ne.s32.totalorder %s52, %s54
      %p61 = scmp.eq.s32.totalorder %s23, 1
      %p62 = por %p60, %p61
      %p63 = scmp.ne.s32.totalorder %s54, %s55
      %p64 = scmp.eq.s32.totalorder %s23, 0
      %p65 = por %p63, %p64
      %p66 = scmp.ne.s32.totalorder %s54, %s55
      %p67 = scmp.eq.s32.totalorder %s24, 1
      %p68 = por %p66, %p67
      %p70 = scmp.ne.s32.totalorder %s55, %s69
      %p71 = scmp.eq.s32.totalorder %s24, 0
      %p72 = por %p70, %p71
      %s74 = sadd.s32 %s73, 1
      %p77 = scmp.eq.s32.totalorder %s18, 1
      %p78 = scmp.ne.s32.totalorder %s73, %s75
      %p79 = scmp.eq.s32.totalorder %s18, 0
      %p80 = por %p78, %p79
      %p81 = scmp.ne.s32.totalorder %s73, %s75
      %p82 = scmp.eq.s32.totalorder %s23, 1
      %p83 = por %p81, %p82
      %p84 = scmp.ne.s32.totalorder %s75, %s76
      %p85 = scmp.eq.s32.totalorder %s23, 0
      %p86 = por %p84, %p85
      %p87 = scmp.ne.s32.totalorder %s75, %s76
      %p88 = scmp.eq.s32.totalorder %s24, 1
      %p89 = por %p87, %p88
      %p91 = scmp.ne.s32.totalorder %s76, %s90
      %p92 = scmp.eq.s32.totalorder %s24, 0
      %p93 = por %p91, %p92
      %s95 = sadd.s32 %s94, 1
      %p98 = scmp.eq.s32.totalorder %s18, 1
      %p99 = scmp.ne.s32.totalorder %s94, %s96
      %p100 = scmp.eq.s32.totalorder %s18, 0
      %p101 = por %p99, %p100
      %p102 = scmp.ne.s32.totalorder %s94, %s96
      %p103 = scmp.eq.s32.totalorder %s23, 1
      %p104 = por %p102, %p103
      %p105 = scmp.ne.s32.totalorder %s96, %s97
      %p106 = scmp.eq.s32.totalorder %s23, 0
      %p107 = por %p105, %p106
      %p108 = scmp.ne.s32.totalorder %s96, %s97
      %p109 = scmp.eq.s32.totalorder %s24, 1
      %p110 = por %p108, %p109
      %p112 = scmp.ne.s32.totalorder %s97, %s111
      %p113 = scmp.eq.s32.totalorder %s24, 0
      %p114 = por %p112, %p113
      %s116 = sadd.s32 %s115, 1
      %p119 = scmp.eq.s32.totalorder %s18, 1
      %p120 = scmp.ne.s32.totalorder %s115, %s117
      %p121 = scmp.eq.s32.totalorder %s18, 0
      %p122 = por %p120, %p121
      %p123 = scmp.ne.s32.totalorder %s115, %s117
      %p124 = scmp.eq.s32.totalorder %s23, 1
      %p125 = por %p123, %p124
      %p126 = scmp.ne.s32.totalorder %s117, %s118
      %p127 = scmp.eq.s32.totalorder %s23, 0
      %p128 = por %p126, %p127
      %p129 = scmp.ne.s32.totalorder %s117, %s118
      %p130 = scmp.eq.s32.totalorder %s24, 1
      %p131 = por %p129, %p130
      %p133 = scmp.ne.s32.totalorder %s118, %s132
      %p134 = scmp.eq.s32.totalorder %s24, 0
      %p135 = por %p133, %p134
      %s136 = ssub.s32 %s18, %s25
      %p137 = scmp.eq.s32.totalorder %s136, 0
      %s139 = sadd.s32 %s138, 1
      %s140 = scalar_select %p137, %s138, %s139
      %p143 = pneg %p137
      %p144 = scmp.eq.s32.totalorder %s18, 1
      %p145 = por %p143, %p144
      %p146 = scmp.ne.s32.totalorder %s138, %s141
      %p147 = scmp.eq.s32.totalorder %s18, 0
      %p148 = por %p146, %p147
      %p149 = scmp.ne.s32.totalorder %s138, %s141
      %p150 = scmp.eq.s32.totalorder %s23, 1
      %p151 = por %p149, %p150
      %p152 = scmp.ne.s32.totalorder %s141, %s142
      %p153 = scmp.eq.s32.totalorder %s23, 0
      %p154 = por %p152, %p153
      %p155 = scmp.ne.s32.totalorder %s141, %s142
      %p156 = scmp.eq.s32.totalorder %s24, 1
      %p157 = por %p155, %p156
      %p159 = scmp.ne.s32.totalorder %s142, %s158
      %p160 = scmp.eq.s32.totalorder %s24, 0
      %p161 = por %p159, %p160
      %p162 = scmp.le.s32.totalorder 1, %s18
      %p163 = scmp.lt.s32.totalorder %s18, 3
      %p164 = pnand %p162, %p163
      %p165 = pneg %p164
      // Predicated region
      $region9: #{tpu_custom_call.1} parent=5 // pred_check
        _
      $region10: #{tpu_custom_call.1} parent=5 // pred_check_branch
        %167 = sbr.rel (%p164) target = $region12
      $region11: #{tpu_custom_call.1} parent=5 // pred_region
        %s168 = ssub.s32 %s18, 1
        // Predicated region
        $region13: #{tpu_custom_call.1} parent=11 // pred_check
          %p169 = pneg %p65
        $region14: #{tpu_custom_call.1} parent=11 // pred_check_branch
          %171 = sbr.rel (%p169) target = $region16
        $region15: #{tpu_custom_call.1} parent=11 // pred_region
          %s173 = ssub.s32 256, 256
          %174 = vsyncadd [#allocation7], %s173
          %s175 = sshll.u32 [#allocation6], 4
          %s176 = int_to_ptr.vmem [resolvable:$true] %s175
          %181 = dma.hbm_to_vmem [thread:$0]  %s1, 256, %s176, [#allocation7], 64, 64, 4
        $region16: #{tpu_custom_call.1} parent=11 // pred_fallthru
          _
        // Predicated region
        $region17: #{tpu_custom_call.1} parent=11 // pred_check
          %p182 = pneg %p86
        $region18: #{tpu_custom_call.1} parent=11 // pred_check_branch
          %184 = sbr.rel (%p182) target = $region20
        $region19: #{tpu_custom_call.1} parent=11 // pred_region
          _
        $region20: #{tpu_custom_call.1} parent=11 // pred_fallthru
          _
        // Predicated region
        $region21: #{tpu_custom_call.1} parent=11 // pred_check
          %p185 = pneg %p107
        $region22: #{tpu_custom_call.1} parent=11 // pred_check_branch
          %187 = sbr.rel (%p185) target = $region24
        $region23: #{tpu_custom_call.1} parent=11 // pred_region
          %s189 = ssub.s32 256, 256
          %190 = vsyncadd [#allocation7], %s189
          %s191 = sshll.u32 [#allocation8], 4
          %s192 = int_to_ptr.vmem [resolvable:$true] %s191
          %197 = dma.hbm_to_vmem [thread:$0]  %s3, 256, %s192, [#allocation7], 64, 64, 4
        $region24: #{tpu_custom_call.1} parent=11 // pred_fallthru
          _
        // Predicated region
        $region25: #{tpu_custom_call.1} parent=11 // pred_check
          %p198 = pneg %p128
        $region26: #{tpu_custom_call.1} parent=11 // pred_check_branch
          %200 = sbr.rel (%p198) target = $region28
        $region27: #{tpu_custom_call.1} parent=11 // pred_region
          _
        $region28: #{tpu_custom_call.1} parent=11 // pred_fallthru
          _
      $region12: #{tpu_custom_call.1} parent=5 // pred_fallthru
        _
      %p201 = scmp.lt.s32.totalorder %s18, 2
      // Predicated region
      $region29: #{tpu_custom_call.1} parent=5 // pred_check
        %p202 = pneg %p201
      $region30: #{tpu_custom_call.1} parent=5 // pred_check_branch
        %204 = sbr.rel (%p202) target = $region32
      $region31: #{tpu_custom_call.1} parent=5 // pred_region
        // Predicated region
        $region33: #{tpu_custom_call.1} parent=31 // pred_check
          %p205 = pneg %p38
        $region34: #{tpu_custom_call.1} parent=31 // pred_check_branch
          %207 = sbr.rel (%p205) target = $region36
        $region35: #{tpu_custom_call.1} parent=31 // pred_region
          %s208 = sand.u32 %s28, 1
          %s209 = scalar_lea.sflag [#allocation4], %s208
          %s210 = sand.u32 %s28, 1
          %s211 = smul.addr %s210, 4
          %s212 = scalar_lea.vmem [#allocation3], %s211
          %s214 = ssub.s32 64, 64
          %215 = vsyncadd %s209, %s214
          %s216 = smul.addr %s18, 64
          %s217 = scalar_lea.hbm %s0, %s216
          %s219 = sshll.u32 %s212, 4
          %s220 = int_to_ptr.vmem [resolvable:$true] %s219
          %222 = dma.hbm_to_vmem [thread:$0]  %s217, 64, %s220, %s209
        $region36: #{tpu_custom_call.1} parent=31 // pred_fallthru
          _
      $region32: #{tpu_custom_call.1} parent=5 // pred_fallthru
        _
      %p223 = scmp.le.s32.totalorder 1, %s18
      %p224 = scmp.lt.s32.totalorder %s18, 3
      %p225 = pnand %p223, %p224
      %p226 = pneg %p225
      // Predicated region
      $region37: #{tpu_custom_call.1} parent=5 // pred_check
        _
      $region38: #{tpu_custom_call.1} parent=5 // pred_check_branch
        %228 = sbr.rel (%p225) target = $region40
      $region39: #{tpu_custom_call.1} parent=5 // pred_region
        %s229 = ssub.s32 %s18, 1
        %s230 = sand.u32 %s31, 1
        %s231 = scalar_lea.sflag [#allocation4], %s230
        %s232 = sand.u32 %s31, 1
        %s233 = smul.addr %s232, 4
        %s234 = scalar_lea.vmem [#allocation3], %s233
        // Predicated region
        $region41: #{tpu_custom_call.1} parent=39 // pred_check
          %p235 = pneg %p44
        $region42: #{tpu_custom_call.1} parent=39 // pred_check_branch
          %237 = sbr.rel (%p235) target = $region44
        $region43: #{tpu_custom_call.1} parent=39 // pred_region
          %238 = dma.done %s231, 64
        $region44: #{tpu_custom_call.1} parent=39 // pred_fallthru
          _
        // Predicated region
        $region45: #{tpu_custom_call.1} parent=39 // pred_check
          %p239 = pneg %p65
        $region46: #{tpu_custom_call.1} parent=39 // pred_check_branch
          %241 = sbr.rel (%p239) target = $region48
        $region47: #{tpu_custom_call.1} parent=39 // pred_region
          %242 = dma.done [#allocation7], 256
        $region48: #{tpu_custom_call.1} parent=39 // pred_fallthru
          _
        // Predicated region
        $region49: #{tpu_custom_call.1} parent=39 // pred_check
          %p243 = pneg %p107
        $region50: #{tpu_custom_call.1} parent=39 // pred_check_branch
          %245 = sbr.rel (%p243) target = $region52
        $region51: #{tpu_custom_call.1} parent=39 // pred_region
          %246 = dma.done [#allocation7], 256
        $region52: #{tpu_custom_call.1} parent=39 // pred_fallthru
          _
        %s247 = sand.u32 %s31, 1
        %s248 = scalar_lea.sflag [#allocation4], %s247
        %s249 = sand.u32 %s31, 1
        %s250 = smul.addr %s249, 4
        %s251 = scalar_lea.vmem [#allocation3], %s250
        %p252 = pneg %p44
        %p253 = pneg %p41
        %p254 = pneg %p65
        %p255 = pneg %p62
        %p256 = pneg %p86
        %p257 = pneg %p83
        %p258 = pneg %p107
        %p259 = pneg %p104
        %p260 = pneg %p128
        %p261 = pneg %p125
        %p262 = pneg %p154
        %p263 = pneg %p151
        %s264 = sand.u32 %s141, 1
        %s265 = scalar_lea.sflag [#allocation5], %s264
        %s266 = sand.u32 %s141, 1
        %s267 = smul.addr %s266, 8
        %s268 = scalar_lea.vmem [#allocation9], %s267
        %v270 = vld [vmem:[%s234] sm:$0xf]
        %v271 = vld [vmem:[#allocation6] sm:$0xf]
        %v272 = vld [vmem:[#allocation6 + $0x4] sm:$0xf]
        %v273 = vld [vmem:[#allocation6 + $0x8] sm:$0xf]
        %v274 = vld [vmem:[#allocation6 + $0xc] sm:$0xf]
        %v275 = vld [vmem:[%s2] sm:$0x1]
        %v277 = vlaneseq
        %v278 = vshrl.u32 %v277, 7
        %v279 = vsub.s32 0, %v278
        %v280 = vrot.slane %v275, %v279
        %v286 = vunpack.c.l.b16 %v271
        %v287 = vunpack.c.l.b16 %v272
        %v288 = vunpack.c.l.b16 %v273
        %v289 = vunpack.c.l.b16 %v274
        %v290 = vpack.c.b16 %v287, %v286
        %v291 = vpack.c.b16 %v289, %v288
        %vm294 = vcmask 261120
        %v296 = vsel %vm294, %v270, 0
        %298 = vmatprep.subr.bf16.mxu0 0
        %299 = vmatpush1.bf16.msra.mxu0 %v290
        %300 = vmatprep.subr.bf16.mxu0 0
        %301 = vmatpush1.bf16.msra.mxu0 %v291
        %302 = vmatprep.subr.bf16.mxu0 0
        %303 = vmatpush1.bf16.msra.mxu0 0
        %304 = vmatprep.subr.bf16.mxu0 0
        %305 = vmatpush1.bf16.msra.mxu0 0
        %306 = vmatprep.subr.bf16.mxu0 0
        %307 = vmatpush1.bf16.msra.mxu0 0
        %308 = vmatprep.subr.bf16.mxu0 0
        %309 = vmatpush1.bf16.msra.mxu0 0
        %310 = vmatprep.subr.bf16.mxu0 0
        %311 = vmatpush1.bf16.msra.mxu0 0
        %312 = vmatprep.subr.bf16.mxu0 0
        %313 = vmatpush1.bf16.msra.mxu0 0
        %314 = vmatprep.subr.bf16.mxu0 0
        %315 = vmatpush1.bf16.msra.mxu0 0
        %316 = vmatprep.subr.bf16.mxu0 0
        %317 = vmatpush1.bf16.msra.mxu0 0
        %318 = vmatprep.subr.bf16.mxu0 0
        %319 = vmatpush1.bf16.msra.mxu0 0
        %320 = vmatprep.subr.bf16.mxu0 0
        %321 = vmatpush1.bf16.msra.mxu0 0
        %322 = vmatprep.subr.bf16.mxu0 0
        %323 = vmatpush1.bf16.msra.mxu0 0
        %324 = vmatprep.subr.bf16.mxu0 0
        %325 = vmatpush1.bf16.msra.mxu0 0
        %326 = vmatprep.subr.bf16.mxu0 0
        %327 = vmatpush1.bf16.msra.mxu0 0
        %328 = vmatprep.subr.bf16.mxu0 0
        %329 = vmatpush1.bf16.msra.mxu0 0
        %330 = vmatprep.mubr.bf16.mxu0 0
        %331 = vmatmul.mubr.bf16.gmra.mrb[0].mxu0 %v296
        %v332 = vpop.f32.mrb[0].mxu0
        %v333 = vadd.f32 %v280, %v332
        %v334 = vpop.f32.mrb[0].mxu0
        %v335 = vpop.f32.mrb[0].mxu0
        %v336 = vpop.f32.mrb[0].mxu0
        %337 = vdwg.mxu0
        %v338 = vpack.c.bf16 %v333, %v333
        %340 = vrot.lane.b32.xlu0 %v338, 96
        %v341 = vpop.permute.xlu0 %340
        %vm342 = vcmask 64512
        %v344 = vsel %vm342, %v338, 0
        %v347 = vsel %vm342, %v341, 0
        %349 = vmatprep.subr.bf16.mxu0 0
        %350 = vmatpush1.bf16.xpose.msra.mxu0 %v347
        %351 = vmatprep.subr.bf16.mxu0 0
        %352 = vmatpush1.bf16.xpose.msra.mxu0 0
        %353 = vmatprep.subr.bf16.mxu0 0
        %354 = vmatpush1.bf16.xpose.msra.mxu0 0
        %355 = vmatprep.subr.bf16.mxu0 0
        %356 = vmatpush1.bf16.xpose.msra.mxu0 0
        %357 = vmatprep.subr.bf16.mxu0 0
        %358 = vmatpush1.bf16.xpose.msra.mxu0 0
        %359 = vmatprep.subr.bf16.mxu0 0
        %360 = vmatpush1.bf16.xpose.msra.mxu0 0
        %361 = vmatprep.subr.bf16.mxu0 0
        %362 = vmatpush1.bf16.xpose.msra.mxu0 0
        %363 = vmatprep.subr.bf16.mxu0 0
        %364 = vmatpush1.bf16.xpose.msra.mxu0 0
        %365 = vmatprep.subr.bf16.mxu0 0
        %366 = vmatpush1.bf16.xpose.msra.mxu0 0
        %367 = vmatprep.subr.bf16.mxu0 0
        %368 = vmatpush1.bf16.xpose.msra.mxu0 0
        %369 = vmatprep.subr.bf16.mxu0 0
        %370 = vmatpush1.bf16.xpose.msra.mxu0 0
        %371 = vmatprep.subr.bf16.mxu0 0
        %372 = vmatpush1.bf16.xpose.msra.mxu0 0
        %373 = vmatprep.subr.bf16.mxu0 0
        %374 = vmatpush1.bf16.xpose.msra.mxu0 0
        %375 = vmatprep.subr.bf16.mxu0 0
        %376 = vmatpush1.bf16.xpose.msra.mxu0 0
        %377 = vmatprep.subr.bf16.mxu0 0
        %378 = vmatpush1.bf16.xpose.msra.mxu0 0
        %379 = vmatprep.subr.bf16.mxu0 0
        %380 = vmatpush1.bf16.xpose.msra.mxu0 0
        %381 = vmatprep.mubr.bf16.mxu0 0
        %382 = vmatmul.mubr.bf16.gmra.mrb[0].mxu0 %v344
        %v383 = vpop.f32.mrb[0].mxu0
        %v384 = vadd.f32 0.0, %v383
        %v385 = vpop.f32.mrb[0].mxu0
        %v386 = vpop.f32.mrb[0].mxu0
        %v387 = vpop.f32.mrb[0].mxu0
        %388 = vdwg.mxu0
        %v389 = vsel %vm342, %v384, -inf
        %390 = vmax.xlane.f32.xlu0 %v389
        %v391 = vpop.xlane.xlu0 %390
        %v392 = vsub.f32 %v384, %v391
        %v393 = vmul.f32 %v392, 1.442695
        %v394 = vpow.pop %v393
        %v395 = vsel %vm342, %v394, 0.0
        %396 = vadd.xlane.f32.xlu0 %v395
        %v397 = vpop.xlane.xlu0 %396
        %v398 = vrcp.pop %v397
        %v399 = vmul.f32 %v394, %v398
        %v400 = vpack.c.bf16 %v399, %v399
        %401 = vrot.lane.b32.xlu0 %v338, 64
        %v402 = vpop.permute.xlu0 %401
        %v404 = vsel %vm342, %v400, 0
        %vm406 = vcmask 1043456
        %v408 = vsel %vm406, %v402, 0
        %410 = vmatprep.subr.bf16.mxu0 0
        %411 = vmatpush1.bf16.msra.mxu0 %v408
        %412 = vmatprep.subr.bf16.mxu0 0
        %413 = vmatpush1.bf16.msra.mxu0 0
        %414 = vmatprep.subr.bf16.mxu0 0
        %415 = vmatpush1.bf16.msra.mxu0 0
        %416 = vmatprep.subr.bf16.mxu0 0
        %417 = vmatpush1.bf16.msra.mxu0 0
        %418 = vmatprep.subr.bf16.mxu0 0
        %419 = vmatpush1.bf16.msra.mxu0 0
        %420 = vmatprep.subr.bf16.mxu0 0
        %421 = vmatpush1.bf16.msra.mxu0 0
        %422 = vmatprep.subr.bf16.mxu0 0
        %423 = vmatpush1.bf16.msra.mxu0 0
        %424 = vmatprep.subr.bf16.mxu0 0
        %425 = vmatpush1.bf16.msra.mxu0 0
        %426 = vmatprep.subr.bf16.mxu0 0
        %427 = vmatpush1.bf16.msra.mxu0 0
        %428 = vmatprep.subr.bf16.mxu0 0
        %429 = vmatpush1.bf16.msra.mxu0 0
        %430 = vmatprep.subr.bf16.mxu0 0
        %431 = vmatpush1.bf16.msra.mxu0 0
        %432 = vmatprep.subr.bf16.mxu0 0
        %433 = vmatpush1.bf16.msra.mxu0 0
        %434 = vmatprep.subr.bf16.mxu0 0
        %435 = vmatpush1.bf16.msra.mxu0 0
        %436 = vmatprep.subr.bf16.mxu0 0
        %437 = vmatpush1.bf16.msra.mxu0 0
        %438 = vmatprep.subr.bf16.mxu0 0
        %439 = vmatpush1.bf16.msra.mxu0 0
        %440 = vmatprep.subr.bf16.mxu0 0
        %441 = vmatpush1.bf16.msra.mxu0 0
        %442 = vmatprep.mubr.bf16.mxu0 0
        %443 = vmatmul.mubr.bf16.gmra.mrb[0].mxu0 %v404
        %v444 = vpop.f32.mrb[0].mxu0
        %v445 = vadd.f32 0.0, %v444
        %v446 = vpop.f32.mrb[0].mxu0
        %v447 = vpop.f32.mrb[0].mxu0
        %v448 = vpop.f32.mrb[0].mxu0
        %449 = vdwg.mxu0
        %v450 = vpack.c.bf16 %v445, %v445
        %vm451 = vcmask 60416
        %452 = vst.msk [vmem:[#allocation2] sm:$0xf] %vm451, %v450
        %453 = vrot.lane.b32.xlu0 %v338, 120
        %v454 = vpop.permute.xlu0 %453
        %455 = vrot.lane.b32.xlu0 %v338, 88
        %v456 = vpop.permute.xlu0 %455
        %v458 = vsel %vm342, %v454, 0
        %v461 = vsel %vm342, %v456, 0
        %463 = vmatprep.subr.bf16.mxu0 0
        %464 = vmatpush1.bf16.xpose.msra.mxu0 %v461
        %465 = vmatprep.subr.bf16.mxu0 0
        %466 = vmatpush1.bf16.xpose.msra.mxu0 0
        %467 = vmatprep.subr.bf16.mxu0 0
        %468 = vmatpush1.bf16.xpose.msra.mxu0 0
        %469 = vmatprep.subr.bf16.mxu0 0
        %470 = vmatpush1.bf16.xpose.msra.mxu0 0
        %471 = vmatprep.subr.bf16.mxu0 0
        %472 = vmatpush1.bf16.xpose.msra.mxu0 0
        %473 = vmatprep.subr.bf16.mxu0 0
        %474 = vmatpush1.bf16.xpose.msra.mxu0 0
        %475 = vmatprep.subr.bf16.mxu0 0
        %476 = vmatpush1.bf16.xpose.msra.mxu0 0
        %477 = vmatprep.subr.bf16.mxu0 0
        %478 = vmatpush1.bf16.xpose.msra.mxu0 0
        %479 = vmatprep.subr.bf16.mxu0 0
        %480 = vmatpush1.bf16.xpose.msra.mxu0 0
        %481 = vmatprep.subr.bf16.mxu0 0
        %482 = vmatpush1.bf16.xpose.msra.mxu0 0
        %483 = vmatprep.subr.bf16.mxu0 0
        %484 = vmatpush1.bf16.xpose.msra.mxu0 0
        %485 = vmatprep.subr.bf16.mxu0 0
        %486 = vmatpush1.bf16.xpose.msra.mxu0 0
        %487 = vmatprep.subr.bf16.mxu0 0
        %488 = vmatpush1.bf16.xpose.msra.mxu0 0
        %489 = vmatprep.subr.bf16.mxu0 0
        %490 = vmatpush1.bf16.xpose.msra.mxu0 0
        %491 = vmatprep.subr.bf16.mxu0 0
        %492 = vmatpush1.bf16.xpose.msra.mxu0 0
        %493 = vmatprep.subr.bf16.mxu0 0
        %494 = vmatpush1.bf16.xpose.msra.mxu0 0
        %495 = vmatprep.mubr.bf16.mxu0 0
        %496 = vmatmul.mubr.bf16.gmra.mrb[0].mxu0 %v458
        %v497 = vpop.f32.mrb[0].mxu0
        %v498 = vadd.f32 0.0, %v497
        %v499 = vpop.f32.mrb[0].mxu0
        %v500 = vpop.f32.mrb[0].mxu0
        %v501 = vpop.f32.mrb[0].mxu0
        %502 = vdwg.mxu0
        %v503 = vsel %vm342, %v498, -inf
        %504 = vmax.xlane.f32.xlu0 %v503
        %v505 = vpop.xlane.xlu0 %504
        %v506 = vsub.f32 %v498, %v505
        %v507 = vmul.f32 %v506, 1.442695
        %v508 = vpow.pop %v507
        %v509 = vsel %vm342, %v508, 0.0
        %510 = vadd.xlane.f32.xlu0 %v509
        %v511 = vpop.xlane.xlu0 %510
        %v512 = vrcp.pop %v511
        %v513 = vmul.f32 %v508, %v512
        %v514 = vpack.c.bf16 %v513, %v513
        %515 = vrot.lane.b32.xlu0 %v338, 56
        %v516 = vpop.permute.xlu0 %515
        %v518 = vsel %vm342, %v514, 0
        %v521 = vsel %vm406, %v516, 0
        %523 = vmatprep.subr.bf16.mxu0 0
        %524 = vmatpush1.bf16.msra.mxu0 %v521
        %525 = vmatprep.subr.bf16.mxu0 0
        %526 = vmatpush1.bf16.msra.mxu0 0
        %527 = vmatprep.subr.bf16.mxu0 0
        %528 = vmatpush1.bf16.msra.mxu0 0
        %529 = vmatprep.subr.bf16.mxu0 0
        %530 = vmatpush1.bf16.msra.mxu0 0
        %531 = vmatprep.subr.bf16.mxu0 0
        %532 = vmatpush1.bf16.msra.mxu0 0
        %533 = vmatprep.subr.bf16.mxu0 0
        %534 = vmatpush1.bf16.msra.mxu0 0
        %535 = vmatprep.subr.bf16.mxu0 0
        %536 = vmatpush1.bf16.msra.mxu0 0
        %537 = vmatprep.subr.bf16.mxu0 0
        %538 = vmatpush1.bf16.msra.mxu0 0
        %539 = vmatprep.subr.bf16.mxu0 0
        %540 = vmatpush1.bf16.msra.mxu0 0
        %541 = vmatprep.subr.bf16.mxu0 0
        %542 = vmatpush1.bf16.msra.mxu0 0
        %543 = vmatprep.subr.bf16.mxu0 0
        %544 = vmatpush1.bf16.msra.mxu0 0
        %545 = vmatprep.subr.bf16.mxu0 0
        %546 = vmatpush1.bf16.msra.mxu0 0
        %547 = vmatprep.subr.bf16.mxu0 0
        %548 = vmatpush1.bf16.msra.mxu0 0
        %549 = vmatprep.subr.bf16.mxu0 0
        %550 = vmatpush1.bf16.msra.mxu0 0
        %551 = vmatprep.subr.bf16.mxu0 0
        %552 = vmatpush1.bf16.msra.mxu0 0
        %553 = vmatprep.subr.bf16.mxu0 0
        %554 = vmatpush1.bf16.msra.mxu0 0
        %555 = vmatprep.mubr.bf16.mxu0 0
        %556 = vmatmul.mubr.bf16.gmra.mrb[0].mxu0 %v518
        %v557 = vpop.f32.mrb[0].mxu0
        %v558 = vadd.f32 0.0, %v557
        %v559 = vpop.f32.mrb[0].mxu0
        %v560 = vpop.f32.mrb[0].mxu0
        %v561 = vpop.f32.mrb[0].mxu0
        %562 = vdwg.mxu0
        %v563 = vpack.c.bf16 %v558, %v558
        %v565 = vunpack.c.l.b16 %v563
        %v566 = vpack.c.b16 %v565, %v565
        %567 = vrot.lane.b32.xlu0 %v566, 8
        %v568 = vpop.permute.xlu0 %567
        %vm570 = vcmask 126016
        %571 = vst.msk [vmem:[#allocation2] sm:$0xf] %vm570, %v568
        %572 = vrot.lane.b32.xlu0 %v338, 112
        %v573 = vpop.permute.xlu0 %572
        %574 = vrot.lane.b32.xlu0 %v338, 80
        %v575 = vpop.permute.xlu0 %574
        %v577 = vsel %vm342, %v573, 0
        %v580 = vsel %vm342, %v575, 0
        %582 = vmatprep.subr.bf16.mxu0 0
        %583 = vmatpush1.bf16.xpose.msra.mxu0 %v580
        %584 = vmatprep.subr.bf16.mxu0 0
        %585 = vmatpush1.bf16.xpose.msra.mxu0 0
        %586 = vmatprep.subr.bf16.mxu0 0
        %587 = vmatpush1.bf16.xpose.msra.mxu0 0
        %588 = vmatprep.subr.bf16.mxu0 0
        %589 = vmatpush1.bf16.xpose.msra.mxu0 0
        %590 = vmatprep.subr.bf16.mxu0 0
        %591 = vmatpush1.bf16.xpose.msra.mxu0 0
        %592 = vmatprep.subr.bf16.mxu0 0
        %593 = vmatpush1.bf16.xpose.msra.mxu0 0
        %594 = vmatprep.subr.bf16.mxu0 0
        %595 = vmatpush1.bf16.xpose.msra.mxu0 0
        %596 = vmatprep.subr.bf16.mxu0 0
        %597 = vmatpush1.bf16.xpose.msra.mxu0 0
        %598 = vmatprep.subr.bf16.mxu0 0
        %599 = vmatpush1.bf16.xpose.msra.mxu0 0
        %600 = vmatprep.subr.bf16.mxu0 0
        %601 = vmatpush1.bf16.xpose.msra.mxu0 0
        %602 = vmatprep.subr.bf16.mxu0 0
        %603 = vmatpush1.bf16.xpose.msra.mxu0 0
        %604 = vmatprep.subr.bf16.mxu0 0
        %605 = vmatpush1.bf16.xpose.msra.mxu0 0
        %606 = vmatprep.subr.bf16.mxu0 0
        %607 = vmatpush1.bf16.xpose.msra.mxu0 0
        %608 = vmatprep.subr.bf16.mxu0 0
        %609 = vmatpush1.bf16.xpose.msra.mxu0 0
        %610 = vmatprep.subr.bf16.mxu0 0
        %611 = vmatpush1.bf16.xpose.msra.mxu0 0
        %612 = vmatprep.subr.bf16.mxu0 0
        %613 = vmatpush1.bf16.xpose.msra.mxu0 0
        %614 = vmatprep.mubr.bf16.mxu0 0
        %615 = vmatmul.mubr.bf16.gmra.mrb[0].mxu0 %v577
        %v616 = vpop.f32.mrb[0].mxu0
        %v617 = vadd.f32 0.0, %v616
        %v618 = vpop.f32.mrb[0].mxu0
        %v619 = vpop.f32.mrb[0].mxu0
        %v620 = vpop.f32.mrb[0].mxu0
        %621 = vdwg.mxu0
        %v622 = vsel %vm342, %v617, -inf
        %623 = vmax.xlane.f32.xlu0 %v622
        %v624 = vpop.xlane.xlu0 %623
        %v625 = vsub.f32 %v617, %v624
        %v626 = vmul.f32 %v625, 1.442695
        %v627 = vpow.pop %v626
        %v628 = vsel %vm342, %v627, 0.0
        %629 = vadd.xlane.f32.xlu0 %v628
        %v630 = vpop.xlane.xlu0 %629
        %v631 = vrcp.pop %v630
        %v632 = vmul.f32 %v627, %v631
        %v633 = vpack.c.bf16 %v632, %v632
        %634 = vrot.lane.b32.xlu0 %v338, 48
        %v635 = vpop.permute.xlu0 %634
        %v637 = vsel %vm342, %v633, 0
        %v640 = vsel %vm406, %v635, 0
        %642 = vmatprep.subr.bf16.mxu0 0
        %643 = vmatpush1.bf16.msra.mxu0 %v640
        %644 = vmatprep.subr.bf16.mxu0 0
        %645 = vmatpush1.bf16.msra.mxu0 0
        %646 = vmatprep.subr.bf16.mxu0 0
        %647 = vmatpush1.bf16.msra.mxu0 0
        %648 = vmatprep.subr.bf16.mxu0 0
        %649 = vmatpush1.bf16.msra.mxu0 0
        %650 = vmatprep.subr.bf16.mxu0 0
        %651 = vmatpush1.bf16.msra.mxu0 0
        %652 = vmatprep.subr.bf16.mxu0 0
        %653 = vmatpush1.bf16.msra.mxu0 0
        %654 = vmatprep.subr.bf16.mxu0 0
        %655 = vmatpush1.bf16.msra.mxu0 0
        %656 = vmatprep.subr.bf16.mxu0 0
        %657 = vmatpush1.bf16.msra.mxu0 0
        %658 = vmatprep.subr.bf16.mxu0 0
        %659 = vmatpush1.bf16.msra.mxu0 0
        %660 = vmatprep.subr.bf16.mxu0 0
        %661 = vmatpush1.bf16.msra.mxu0 0
        %662 = vmatprep.subr.bf16.mxu0 0
        %663 = vmatpush1.bf16.msra.mxu0 0
        %664 = vmatprep.subr.bf16.mxu0 0
        %665 = vmatpush1.bf16.msra.mxu0 0
        %666 = vmatprep.subr.bf16.mxu0 0
        %667 = vmatpush1.bf16.msra.mxu0 0
        %668 = vmatprep.subr.bf16.mxu0 0
        %669 = vmatpush1.bf16.msra.mxu0 0
        %670 = vmatprep.subr.bf16.mxu0 0
        %671 = vmatpush1.bf16.msra.mxu0 0
        %672 = vmatprep.subr.bf16.mxu0 0
        %673 = vmatpush1.bf16.msra.mxu0 0
        %674 = vmatprep.mubr.bf16.mxu0 0
        %675 = vmatmul.mubr.bf16.gmra.mrb[0].mxu0 %v637
        %v676 = vpop.f32.mrb[0].mxu0
        %v677 = vadd.f32 0.0, %v676
        %v678 = vpop.f32.mrb[0].mxu0
        %v679 = vpop.f32.mrb[0].mxu0
        %v680 = vpop.f32.mrb[0].mxu0
        %681 = vdwg.mxu0
        %v682 = vpack.c.bf16 %v677, %v677
        %v684 = vunpack.c.l.b16 %v682
        %v685 = vpack.c.b16 %v684, %v684
        %686 = vrot.lane.b32.xlu0 %v685, 16
        %v687 = vpop.permute.xlu0 %686
        %vm689 = vcmask 191616
        %690 = vst.msk [vmem:[#allocation2] sm:$0xf] %vm689, %v687
        %691 = vrot.lane.b32.xlu0 %v338, 104
        %v692 = vpop.permute.xlu0 %691
        %693 = vrot.lane.b32.xlu0 %v338, 72
        %v694 = vpop.permute.xlu0 %693
        %v696 = vsel %vm342, %v692, 0
        %v699 = vsel %vm342, %v694, 0
        %701 = vmatprep.subr.bf16.mxu0 0
        %702 = vmatpush1.bf16.xpose.msra.mxu0 %v699
        %703 = vmatprep.subr.bf16.mxu0 0
        %704 = vmatpush1.bf16.xpose.msra.mxu0 0
        %705 = vmatprep.subr.bf16.mxu0 0
        %706 = vmatpush1.bf16.xpose.msra.mxu0 0
        %707 = vmatprep.subr.bf16.mxu0 0
        %708 = vmatpush1.bf16.xpose.msra.mxu0 0
        %709 = vmatprep.subr.bf16.mxu0 0
        %710 = vmatpush1.bf16.xpose.msra.mxu0 0
        %711 = vmatprep.subr.bf16.mxu0 0
        %712 = vmatpush1.bf16.xpose.msra.mxu0 0
        %713 = vmatprep.subr.bf16.mxu0 0
        %714 = vmatpush1.bf16.xpose.msra.mxu0 0
        %715 = vmatprep.subr.bf16.mxu0 0
        %716 = vmatpush1.bf16.xpose.msra.mxu0 0
        %717 = vmatprep.subr.bf16.mxu0 0
        %718 = vmatpush1.bf16.xpose.msra.mxu0 0
        %719 = vmatprep.subr.bf16.mxu0 0
        %720 = vmatpush1.bf16.xpose.msra.mxu0 0
        %721 = vmatprep.subr.bf16.mxu0 0
        %722 = vmatpush1.bf16.xpose.msra.mxu0 0
        %723 = vmatprep.subr.bf16.mxu0 0
        %724 = vmatpush1.bf16.xpose.msra.mxu0 0
        %725 = vmatprep.subr.bf16.mxu0 0
        %726 = vmatpush1.bf16.xpose.msra.mxu0 0
        %727 = vmatprep.subr.bf16.mxu0 0
        %728 = vmatpush1.bf16.xpose.msra.mxu0 0
        %729 = vmatprep.subr.bf16.mxu0 0
        %730 = vmatpush1.bf16.xpose.msra.mxu0 0
        %731 = vmatprep.subr.bf16.mxu0 0
        %732 = vmatpush1.bf16.xpose.msra.mxu0 0
        %733 = vmatprep.mubr.bf16.mxu0 0
        %734 = vmatmul.mubr.bf16.gmra.mrb[0].mxu0 %v696
        %v735 = vpop.f32.mrb[0].mxu0
        %v736 = vadd.f32 0.0, %v735
        %v737 = vpop.f32.mrb[0].mxu0
        %v738 = vpop.f32.mrb[0].mxu0
        %v739 = vpop.f32.mrb[0].mxu0
        %740 = vdwg.mxu0
        %v741 = vsel %vm342, %v736, -inf
        %742 = vmax.xlane.f32.xlu0 %v741
        %v743 = vpop.xlane.xlu0 %742
        %v744 = vsub.f32 %v736, %v743
        %v745 = vmul.f32 %v744, 1.442695
        %v746 = vpow.pop %v745
        %v747 = vsel %vm342, %v746, 0.0
        %748 = vadd.xlane.f32.xlu0 %v747
        %v749 = vpop.xlane.xlu0 %748
        %v750 = vrcp.pop %v749
        %v751 = vmul.f32 %v746, %v750
        %v752 = vpack.c.bf16 %v751, %v751
        %753 = vrot.lane.b32.xlu0 %v338, 40
        %v754 = vpop.permute.xlu0 %753
        %v756 = vsel %vm342, %v752, 0
        %v759 = vsel %vm406, %v754, 0
        %761 = vmatprep.subr.bf16.mxu0 0
        %762 = vmatpush1.bf16.msra.mxu0 %v759
        %763 = vmatprep.subr.bf16.mxu0 0
        %764 = vmatpush1.bf16.msra.mxu0 0
        %765 = vmatprep.subr.bf16.mxu0 0
        %766 = vmatpush1.bf16.msra.mxu0 0
        %767 = vmatprep.subr.bf16.mxu0 0
        %768 = vmatpush1.bf16.msra.mxu0 0
        %769 = vmatprep.subr.bf16.mxu0 0
        %770 = vmatpush1.bf16.msra.mxu0 0
        %771 = vmatprep.subr.bf16.mxu0 0
        %772 = vmatpush1.bf16.msra.mxu0 0
        %773 = vmatprep.subr.bf16.mxu0 0
        %774 = vmatpush1.bf16.msra.mxu0 0
        %775 = vmatprep.subr.bf16.mxu0 0
        %776 = vmatpush1.bf16.msra.mxu0 0
        %777 = vmatprep.subr.bf16.mxu0 0
        %778 = vmatpush1.bf16.msra.mxu0 0
        %779 = vmatprep.subr.bf16.mxu0 0
        %780 = vmatpush1.bf16.msra.mxu0 0
        %781 = vmatprep.subr.bf16.mxu0 0
        %782 = vmatpush1.bf16.msra.mxu0 0
        %783 = vmatprep.subr.bf16.mxu0 0
        %784 = vmatpush1.bf16.msra.mxu0 0
        %785 = vmatprep.subr.bf16.mxu0 0
        %786 = vmatpush1.bf16.msra.mxu0 0
        %787 = vmatprep.subr.bf16.mxu0 0
        %788 = vmatpush1.bf16.msra.mxu0 0
        %789 = vmatprep.subr.bf16.mxu0 0
        %790 = vmatpush1.bf16.msra.mxu0 0
        %791 = vmatprep.subr.bf16.mxu0 0
        %792 = vmatpush1.bf16.msra.mxu0 0
        %793 = vmatprep.mubr.bf16.mxu0 0
        %794 = vmatmul.mubr.bf16.gmra.mrb[0].mxu0 %v756
        %v795 = vpop.f32.mrb[0].mxu0
        %v796 = vadd.f32 0.0, %v795
        %v797 = vpop.f32.mrb[0].mxu0
        %v798 = vpop.f32.mrb[0].mxu0
        %v799 = vpop.f32.mrb[0].mxu0
        %800 = vdwg.mxu0
        %v801 = vpack.c.bf16 %v796, %v796
        %v803 = vunpack.c.l.b16 %v801
        %v804 = vpack.c.b16 %v803, %v803
        %805 = vrot.lane.b32.xlu0 %v804, 24
        %v806 = vpop.permute.xlu0 %805
        %vm808 = vcmask 257216
        %809 = vst.msk [vmem:[#allocation2] sm:$0xf] %vm808, %v806
        %v810 = vld [vmem:[#allocation2] sm:$0xf]
        %v811 = vld [vmem:[#allocation8] sm:$0xf]
        %v812 = vld [vmem:[#allocation8 + $0x4] sm:$0xf]
        %v813 = vld [vmem:[#allocation8 + $0x8] sm:$0xf]
        %v814 = vld [vmem:[#allocation8 + $0xc] sm:$0xf]
        %v815 = vld [vmem:[%s4] sm:$0x1]
        %v817 = vlaneseq
        %v818 = vshrl.u32 %v817, 7
        %v819 = vsub.s32 0, %v818
        %v820 = vrot.slane %v815, %v819
        %v826 = vunpack.c.l.b16 %v811
        %v827 = vunpack.c.l.b16 %v812
        %v828 = vunpack.c.l.b16 %v813
        %v829 = vunpack.c.l.b16 %v814
        %v830 = vpack.c.b16 %v827, %v826
        %v831 = vpack.c.b16 %v829, %v828
        %v835 = vsel %vm294, %v810, 0
        %837 = vmatprep.subr.bf16.mxu0 0
        %838 = vmatpush1.bf16.msra.mxu0 %v830
        %839 = vmatprep.subr.bf16.mxu0 0
        %840 = vmatpush1.bf16.msra.mxu0 %v831
        %841 = vmatprep.subr.bf16.mxu0 0
        %842 = vmatpush1.bf16.msra.mxu0 0
        %843 = vmatprep.subr.bf16.mxu0 0
        %844 = vmatpush1.bf16.msra.mxu0 0
        %845 = vmatprep.subr.bf16.mxu0 0
        %846 = vmatpush1.bf16.msra.mxu0 0
        %847 = vmatprep.subr.bf16.mxu0 0
        %848 = vmatpush1.bf16.msra.mxu0 0
        %849 = vmatprep.subr.bf16.mxu0 0
        %850 = vmatpush1.bf16.msra.mxu0 0
        %851 = vmatprep.subr.bf16.mxu0 0
        %852 = vmatpush1.bf16.msra.mxu0 0
        %853 = vmatprep.subr.bf16.mxu0 0
        %854 = vmatpush1.bf16.msra.mxu0 0
        %855 = vmatprep.subr.bf16.mxu0 0
        %856 = vmatpush1.bf16.msra.mxu0 0
        %857 = vmatprep.subr.bf16.mxu0 0
        %858 = vmatpush1.bf16.msra.mxu0 0
        %859 = vmatprep.subr.bf16.mxu0 0
        %860 = vmatpush1.bf16.msra.mxu0 0
        %861 = vmatprep.subr.bf16.mxu0 0
        %862 = vmatpush1.bf16.msra.mxu0 0
        %863 = vmatprep.subr.bf16.mxu0 0
        %864 = vmatpush1.bf16.msra.mxu0 0
        %865 = vmatprep.subr.bf16.mxu0 0
        %866 = vmatpush1.bf16.msra.mxu0 0
        %867 = vmatprep.subr.bf16.mxu0 0
        %868 = vmatpush1.bf16.msra.mxu0 0
        %869 = vmatprep.mubr.bf16.mxu0 0
        %870 = vmatmul.mubr.bf16.gmra.mrb[0].mxu0 %v835
        %v871 = vpop.f32.mrb[0].mxu0
        %v872 = vadd.f32 %v820, %v871
        %v873 = vpop.f32.mrb[0].mxu0
        %v874 = vpop.f32.mrb[0].mxu0
        %v875 = vpop.f32.mrb[0].mxu0
        %876 = vdwg.mxu0
        %877 = vst.msk [vmem:[%s268] sm:$0xff] %vm294, %v872
        %s878 = sand.u32 %s141, 1
        %s879 = scalar_lea.sflag [#allocation5], %s878
        %s880 = sand.u32 %s141, 1
        %s881 = smul.addr %s880, 8
        %s882 = scalar_lea.vmem [#allocation9], %s881
        // Predicated region
        $region53: #{tpu_custom_call.1} parent=39 // pred_check
          %p883 = pneg %p151
        $region54: #{tpu_custom_call.1} parent=39 // pred_check_branch
          %885 = sbr.rel (%p883) target = $region56
        $region55: #{tpu_custom_call.1} parent=39 // pred_region
          %s887 = ssub.s32 128, 128
          %888 = vsyncadd %s879, %s887
          %s889 = smul.addr %s23, 128
          %s890 = scalar_lea.hbm %s5, %s889
          %s892 = sshll.u32 %s882, 4
          %s893 = int_to_ptr.vmem [resolvable:$true] %s892
          %895 = dma.vmem_to_hbm [thread:$0]  %s893, 128, %s890, %s879
        $region56: #{tpu_custom_call.1} parent=39 // pred_fallthru
          _
      $region40: #{tpu_custom_call.1} parent=5 // pred_fallthru
        _
      %p896 = scmp.le.s32.totalorder 2, %s18
      // Predicated region
      $region57: #{tpu_custom_call.1} parent=5 // pred_check
        %p897 = pneg %p896
      $region58: #{tpu_custom_call.1} parent=5 // pred_check_branch
        %899 = sbr.rel (%p897) target = $region60
      $region59: #{tpu_custom_call.1} parent=5 // pred_region
        %s900 = ssub.s32 %s18, 2
        // Predicated region
        $region61: #{tpu_custom_call.1} parent=59 // pred_check
          %p901 = pneg %p157
        $region62: #{tpu_custom_call.1} parent=59 // pred_check_branch
          %903 = sbr.rel (%p901) target = $region64
        $region63: #{tpu_custom_call.1} parent=59 // pred_region
          %s904 = sand.u32 %s142, 1
          %s905 = scalar_lea.sflag [#allocation5], %s904
          %s906 = sand.u32 %s142, 1
          %s907 = smul.addr %s906, 8
          %s908 = scalar_lea.vmem [#allocation9], %s907
          %909 = dma.done %s905, 128
        $region64: #{tpu_custom_call.1} parent=59 // pred_fallthru
          _
      $region60: #{tpu_custom_call.1} parent=5 // pred_fallthru
        _
    $region6: #{tpu_custom_call.1} parent=1 // loop_footer
      %s22 = sadd.s32 1, %s18
    $region7: #{tpu_custom_call.1} parent=1 // loop_footer_branch
      %17 = sbr.rel target = $region3
    $region8: #{tpu_custom_call.1} parent=1 // loop_exit
      _
    %910 = vsyncpa [#allocation4], 1
    %s911 = scalar_lea.sflag [#allocation4], 1
    %912 = vsyncpa %s911, 1
    %913 = vsyncpa [#allocation7], 1
    %914 = vsyncpa [#allocation5], 1
    %s915 = scalar_lea.sflag [#allocation5], 1
    %916 = vsyncpa %s915, 1

</llo_original>
